<compile_context>
chip_gen: v5e
topology: v5e:2x2
jax: 0.10.0
libtpu: 0.0.40
codegen_flags: <defaults>
</compile_context>

<pallas_src>
import functools

import jax
import jax.numpy as jnp
from jax.experimental import pallas as pl
from jax.experimental.pallas import tpu as pltpu


def _round_up(x: int, m: int) -> int:
    return ((x + m - 1) // m) * m


def _pick_block_b(batch: int) -> int:
    """Batch tile: big enough to feed the MXU, >=2 tiles for large B (v7x 2 TCs)."""
    if batch <= 64:
        return batch                      # == full dim -> always a legal block dim
    half = -(-batch // 2)                 # aim for at least two grid tiles
    return min(512, _round_up(half, 8))   # multiple of 8 (f32 sublane), cap at 512


def _contrastive_head_kernel(x_ref, w1_ref, b1_ref, w2_ref, b2_ref, o_ref):
    """One batch-tile of the ContrastiveHead forward pass.

    x_ref : (tb, H)      input activations tile (input dtype)
    w1_ref: (H, H)       dense weight, (in, out) layout, compute dtype (bf16/f32)
    b1_ref: (1, H)       dense bias, f32
    w2_ref: (H, Pp)      out_proj weight, (in, out) layout, zero-padded to Pp, compute dtype
    b2_ref: (1, Pp)      out_proj bias, zero-padded, f32
    o_ref : (tb, Pp)     L2-normalized output tile (lane-dense, padded cols are 0)
    """
    cdt = w1_ref.dtype  # MXU operand dtype (bf16 on the fast path)

    # dense: x @ W1 (MXU, f32 accumulation) + b1 (f32)
    x = x_ref[...].astype(cdt)
    h = jnp.dot(x, w1_ref[...], preferred_element_type=jnp.float32)
    h = h + b1_ref[...]

    # exact (erf-based) GELU in f32, matching torch.nn.functional.gelu default
    inv_sqrt2 = jnp.float32(0.7071067811865476)
    h = 0.5 * h * (1.0 + jax.lax.erf(h * inv_sqrt2))

    # out_proj: h @ W2 (MXU, f32 accumulation) + b2 (f32)
    y = jnp.dot(h.astype(cdt), w2_ref[...], preferred_element_type=jnp.float32)
    y = y + b2_ref[...]

    # F.normalize(p=2, dim=-1, eps=1e-12):  y / max(||y||, eps)
    #   == y * rsqrt(max(sum(y^2), eps^2))   (single EUP rsqrt, no sqrt + divide)
    # Zero-padded columns contribute 0 to sumsq, so the norm is over the real P.
    sumsq = jnp.sum(y * y, axis=-1, keepdims=True)
    inv = jax.lax.rsqrt(jnp.maximum(sumsq, jnp.float32(1e-24)))
    o_ref[...] = (y * inv).astype(o_ref.dtype)


def prepare_params(w_dense, b_dense, w_out, b_out, *, compute_dtype=jnp.bfloat16):
    """One-time parameter prep (outside the jitted forward):
    transpose to (in, out), cast weights to the MXU compute dtype, keep biases
    in f32, and zero-pad the projection dim to a multiple of 128 lanes."""
    H = w_dense.shape[0]
    P = w_out.shape[0]
    P_pad = _round_up(P, 128)

    w1 = jnp.asarray(w_dense.T, dtype=compute_dtype)                 # (H, H)
    b1 = jnp.asarray(b_dense, dtype=jnp.float32).reshape(1, H)       # (1, H)
    w2 = jnp.asarray(w_out.T, dtype=compute_dtype)                   # (H, P)
    w2 = jnp.pad(w2, ((0, 0), (0, P_pad - P)))                       # (H, Pp)
    b2 = jnp.pad(jnp.asarray(b_out, dtype=jnp.float32),
                 (0, P_pad - P)).reshape(1, P_pad)                   # (1, Pp)
    return (w1, b1, w2, b2)


@functools.partial(jax.jit, static_argnames=("projection_size",))
def contrastive_head_forward(x, params, *, projection_size):
    """x: (B, H).  params: output of prepare_params.  Returns (B, projection_size)."""
    w1, b1, w2, b2 = params
    B, H = x.shape
    P_pad = w2.shape[1]

    block_b = _pick_block_b(B)
    grid = (pl.cdiv(B, block_b),)

    # VMEM budget: double-buffered x/out tiles + (worst case double-buffered)
    # grid-invariant weights/biases, 1.5x safety, capped below v7x's 64 MiB.
    bytes_xo = 2 * block_b * (H + P_pad) * x.dtype.itemsize
    bytes_w = 2 * (H * H + H * P_pad) * w1.dtype.itemsize
    bytes_b = 2 * (H + P_pad) * 4
    vmem_limit = int(1.5 * (bytes_xo + bytes_w + bytes_b)) + (2 << 20)
    vmem_limit = min(max(vmem_limit, 16 << 20), 48 << 20)

    out_padded = pl.pallas_call(
        _contrastive_head_kernel,
        out_shape=jax.ShapeDtypeStruct((B, P_pad), x.dtype),
        grid_spec=pltpu.PrefetchScalarGridSpec(
            num_scalar_prefetch=0,
            grid=grid,
            in_specs=[
                pl.BlockSpec((block_b, H), lambda i: (i, 0)),    # x tile
                pl.BlockSpec((H, H), lambda i: (0, 0)),          # w1 (grid-invariant)
                pl.BlockSpec((1, H), lambda i: (0, 0)),          # b1
                pl.BlockSpec((H, P_pad), lambda i: (0, 0)),      # w2 (padded, grid-invariant)
                pl.BlockSpec((1, P_pad), lambda i: (0, 0)),      # b2 (padded)
            ],
            out_specs=pl.BlockSpec((block_b, P_pad), lambda i: (i, 0)),
        ),
        compiler_params=pltpu.CompilerParams(
            dimension_semantics=("parallel",),
            vmem_limit_bytes=vmem_limit,
        ),
    )(x, w1, b1, w2, b2)

    return out_padded[:, :projection_size]


def _reference(x, w_dense, b_dense, w_out, b_out):
    """Pure-JAX f32 reference mirroring the PyTorch forward."""
    h = x @ w_dense.T + b_dense
    h = jax.nn.gelu(h, approximate=False)
    y = h @ w_out.T + b_out
    norm = jnp.sqrt(jnp.sum(y * y, axis=-1, keepdims=True))
    return y / jnp.maximum(norm, 1e-12)


if __name__ == "__main__":
    # Small shapes consistent with the module: batch=8, hidden=32, projection=16.
    B, H, P = 8, 32, 16

    key = jax.random.PRNGKey(0)
    k_x, k_w1, k_w2 = jax.random.split(key, 3)

    x = jax.random.normal(k_x, (B, H), dtype=jnp.float32)

    # Parameter init matching the module's __init__:
    #   dense.weight ~ N(0, 0.01), dense.bias = 0
    #   out_proj.weight ~ N(0, 1/hidden), out_proj.bias = 0
    w_dense = 0.01 * jax.random.normal(k_w1, (H, H), dtype=jnp.float32)
    b_dense = jnp.zeros((H,), dtype=jnp.float32)
    w_out = (1.0 / H) * jax.random.normal(k_w2, (P, H), dtype=jnp.float32)
    b_out = jnp.zeros((P,), dtype=jnp.float32)

    ref = _reference(x, w_dense, b_dense, w_out, b_out)

    # --- f32 compute path: exact-semantics check against the reference. ---
    params_f32 = prepare_params(w_dense, b_dense, w_out, b_out,
                                compute_dtype=jnp.float32)
    out_f32 = contrastive_head_forward(x, params_f32, projection_size=P)
    out_f32 = jax.block_until_ready(out_f32)
    assert out_f32.shape == (B, P)
    assert jnp.allclose(out_f32, ref, atol=1e-5, rtol=1e-5), "f32 path mismatch"
    assert jnp.allclose(jnp.linalg.norm(out_f32, axis=-1), 1.0, atol=1e-4)

    # --- bf16 MXU fast path: loosened tolerance (bf16 operand rounding). ---
    params_bf16 = prepare_params(w_dense, b_dense, w_out, b_out,
                                 compute_dtype=jnp.bfloat16)
    out_bf16 = contrastive_head_forward(x, params_bf16, projection_size=P)
    out_bf16 = jax.block_until_ready(out_bf16)
    assert out_bf16.shape == (B, P)
    assert jnp.allclose(out_bf16, ref, atol=2e-2), "bf16 path mismatch"
    assert jnp.allclose(jnp.linalg.norm(out_bf16, axis=-1), 1.0, atol=1e-3)

    print("KERNEL_OK")
</pallas_src>

<mosaic_0001>
module attributes {stable_mosaic.version = 11 : i64} {
  func.func @_contrastive_head_kernel(%arg0: i32, %arg1: memref<8x32xf32, #tpu.memory_space<vmem>>, %arg2: memref<32x32xf32, #tpu.memory_space<vmem>>, %arg3: memref<1x32xf32, #tpu.memory_space<vmem>>, %arg4: memref<32x128xf32, #tpu.memory_space<vmem>>, %arg5: memref<1x128xf32, #tpu.memory_space<vmem>>, %arg6: memref<8x128xf32, #tpu.memory_space<vmem>>) attributes {dimension_semantics = [#tpu.dimension_semantics<parallel>], iteration_bounds = array<i64: 1>, scalar_prefetch = 0 : i64, scratch_operands = 0 : i64, tpu.core_type = #tpu.core_type<tc>, window_params = [{transform_indices = @transform_0, window_bounds = array<i64: 8, 32>}, {pipeline_mode = #tpu.pipeline_mode<synchronous>, transform_indices = @transform_1, window_bounds = array<i64: 32, 32>}, {pipeline_mode = #tpu.pipeline_mode<synchronous>, transform_indices = @transform_2, window_bounds = array<i64: 1, 32>}, {pipeline_mode = #tpu.pipeline_mode<synchronous>, transform_indices = @transform_3, window_bounds = array<i64: 32, 128>}, {pipeline_mode = #tpu.pipeline_mode<synchronous>, transform_indices = @transform_4, window_bounds = array<i64: 1, 128>}, {transform_indices = @transform_5, window_bounds = array<i64: 8, 128>}]} {
    %c0 = arith.constant 0 : index
    %c0_0 = arith.constant 0 : index
    %0 = vector.load %arg1[%c0, %c0_0] : memref<8x32xf32, #tpu.memory_space<vmem>>, vector<8x32xf32>
    %c0_1 = arith.constant 0 : index
    %c0_2 = arith.constant 0 : index
    %1 = vector.load %arg2[%c0_1, %c0_2] : memref<32x32xf32, #tpu.memory_space<vmem>>, vector<32x32xf32>
    %cst = arith.constant dense<0.000000e+00> : vector<8x32xf32>
    %2 = tpu.matmul %0, %1, %cst {dimension_numbers = #tpu.dot_dimension_numbers<[1], [0], [0], [1], [0, 0, 1, 1], [], []>} : vector<8x32xf32>, vector<32x32xf32>, vector<8x32xf32> -> vector<8x32xf32>
    %c0_3 = arith.constant 0 : index
    %c0_4 = arith.constant 0 : index
    %3 = vector.load %arg3[%c0_3, %c0_4] : memref<1x32xf32, #tpu.memory_space<vmem>>, vector<1x32xf32>
    %4 = vector.broadcast %3 : vector<1x32xf32> to vector<8x32xf32>
    %5 = arith.addf %2, %4 : vector<8x32xf32>
    %cst_5 = arith.constant 5.000000e-01 : f32
    %6 = vector.broadcast %cst_5 : f32 to vector<8x32xf32>
    %7 = arith.mulf %6, %5 : vector<8x32xf32>
    %cst_6 = arith.constant 0.707106769 : f32
    %8 = vector.broadcast %cst_6 : f32 to vector<8x32xf32>
    %9 = arith.mulf %5, %8 : vector<8x32xf32>
    %10 = math.erf %9 : vector<8x32xf32>
    %cst_7 = arith.constant 1.000000e+00 : f32
    %11 = vector.broadcast %cst_7 : f32 to vector<8x32xf32>
    %12 = arith.addf %11, %10 : vector<8x32xf32>
    %13 = arith.mulf %7, %12 : vector<8x32xf32>
    %c0_8 = arith.constant 0 : index
    %c0_9 = arith.constant 0 : index
    %14 = vector.load %arg4[%c0_8, %c0_9] : memref<32x128xf32, #tpu.memory_space<vmem>>, vector<32x128xf32>
    %cst_10 = arith.constant dense<0.000000e+00> : vector<8x128xf32>
    %15 = tpu.matmul %13, %14, %cst_10 {dimension_numbers = #tpu.dot_dimension_numbers<[1], [0], [0], [1], [0, 0, 1, 1], [], []>} : vector<8x32xf32>, vector<32x128xf32>, vector<8x128xf32> -> vector<8x128xf32>
    %c0_11 = arith.constant 0 : index
    %c0_12 = arith.constant 0 : index
    %16 = vector.load %arg5[%c0_11, %c0_12] : memref<1x128xf32, #tpu.memory_space<vmem>>, vector<1x128xf32>
    %17 = vector.broadcast %16 : vector<1x128xf32> to vector<8x128xf32>
    %18 = arith.addf %15, %17 : vector<8x128xf32>
    %19 = arith.mulf %18, %18 : vector<8x128xf32>
    %cst_13 = arith.constant dense<0.000000e+00> : vector<8xf32>
    %20 = vector.multi_reduction <add>, %19, %cst_13 [1] : vector<8x128xf32> to vector<8xf32>
    %21 = vector.shape_cast %20 : vector<8xf32> to vector<8x1xf32>
    %cst_14 = arith.constant 1.000000e-24 : f32
    %22 = vector.broadcast %cst_14 : f32 to vector<8x1xf32>
    %23 = arith.maximumf %21, %22 : vector<8x1xf32>
    %24 = math.rsqrt %23 : vector<8x1xf32>
    %25 = vector.broadcast %24 : vector<8x1xf32> to vector<8x128xf32>
    %26 = arith.mulf %18, %25 : vector<8x128xf32>
    %c0_15 = arith.constant 0 : index
    %c0_16 = arith.constant 0 : index
    %27 = vector.load %arg6[%c0_15, %c0_16] : memref<8x128xf32, #tpu.memory_space<vmem>>, vector<8x128xf32>
    tpu.vector_store %arg6[%c0_15, %c0_16], %26 {strides = array<i32>} : memref<8x128xf32, #tpu.memory_space<vmem>>, vector<8x128xf32>,
    return
  }
  func.func @transform_0(%arg0: i32) -> (i32, i32) {
    %c0_i32 = arith.constant 0 : i32
    %c0_i32_0 = arith.constant 0 : i32
    return %arg0, %c0_i32 : i32, i32
  }
  func.func @transform_1(%arg0: i32) -> (i32, i32) {
    %c0_i32 = arith.constant 0 : i32
    %c0_i32_0 = arith.constant 0 : i32
    %c0_i32_1 = arith.constant 0 : i32
    return %c0_i32, %c0_i32_0 : i32, i32
  }
  func.func @transform_2(%arg0: i32) -> (i32, i32) {
    %c0_i32 = arith.constant 0 : i32
    %c0_i32_0 = arith.constant 0 : i32
    %c0_i32_1 = arith.constant 0 : i32
    return %c0_i32, %c0_i32_0 : i32, i32
  }
  func.func @transform_3(%arg0: i32) -> (i32, i32) {
    %c0_i32 = arith.constant 0 : i32
    %c0_i32_0 = arith.constant 0 : i32
    %c0_i32_1 = arith.constant 0 : i32
    return %c0_i32, %c0_i32_0 : i32, i32
  }
  func.func @transform_4(%arg0: i32) -> (i32, i32) {
    %c0_i32 = arith.constant 0 : i32
    %c0_i32_0 = arith.constant 0 : i32
    %c0_i32_1 = arith.constant 0 : i32
    return %c0_i32, %c0_i32_0 : i32, i32
  }
  func.func @transform_5(%arg0: i32) -> (i32, i32) {
    %c0_i32 = arith.constant 0 : i32
    %c0_i32_0 = arith.constant 0 : i32
    return %arg0, %c0_i32 : i32, i32
  }
}

</mosaic_0001>

<llo_original>
// kernel: contrastive_head_forward.1
$region0: #{contrastive_head_forward.1}
  #allocation0 [shape = 'u32[]', space=smem, size = 0x4, offset = 0x4, fixed_abs, tag = 'smem constant byte address 0x4 - core index']
  #allocation1 [shape = 'u32[72,128]{1,0:T(1,128)}', space=vmem, size = 0x9000, scoped, tag = 'internal scratch']
  %s0 = inlined_call_operand.hbm [shape: f32[8,32], index: 0, kind: input, shape index: {}]
  %s1 = inlined_call_operand.hbm [shape: f32[32,32], index: 1, kind: input, shape index: {}]
  %s2 = inlined_call_operand.vmem [shape: f32[1,32], index: 2, kind: input, shape index: {}]
  %s3 = inlined_call_operand.hbm [shape: f32[32,128], index: 3, kind: input, shape index: {}]
  %s4 = inlined_call_operand.vmem [shape: f32[1,128], index: 4, kind: input, shape index: {}]
  %s5 = inlined_call_operand.hbm [shape: f32[8,128], index: 5, kind: output, shape index: {}]
  %s6 = sld [smem:[#allocation0]]
  $region42: #{contrastive_head_forward.1} parent=0
    _
  %s8 = ssub.s32 1, %s6
  %s9 = scalar_select 0, %s8, %s6
  $region1: #{contrastive_head_forward.1} parent=0
    #allocation2 [shape = 'u8[4096]{0}', space=vmem, size = 0x1000, scoped, tag = 'input window, operand 0, single buffered']
    #allocation3 [shape = 's32[1]{0}', space=sflag, size = 0x4, scoped, tag = 'scoped memory for contrastive_head_forward.1']
    #allocation4 [shape = 's32[1]{0}', space=sflag, size = 0x4, scoped, tag = 'scoped memory for contrastive_head_forward.1']
    #allocation5 [shape = 'u8[16384]{0}', space=vmem, size = 0x4000, scoped, tag = 'input window, operand 1, single buffered']
    #allocation6 [shape = 's32[1]{0}', space=sflag, size = 0x4, scoped, tag = 'scoped memory for contrastive_head_forward.1']
    #allocation7 [shape = 'u8[16384]{0}', space=vmem, size = 0x4000, scoped, tag = 'input window, operand 3, single buffered']
    #allocation8 [shape = 'u8[4096]{0}', space=vmem, size = 0x1000, scoped, tag = 'output window, operand 0, single buffered']
    %10 = vsyncpa [#allocation3], 0
    %11 = vsyncpa [#allocation6], 0
    %12 = vsyncpa [#allocation4], 0
    // Predicated region
    $region2: #{contrastive_head_forward.1} parent=1 // pred_check
      _
    $region3: #{contrastive_head_forward.1} parent=1 // pred_check_branch
      %14 = sbr.rel (0) target = $region5
    $region4: #{contrastive_head_forward.1} parent=1 // pred_region
      %16 = vsyncadd [#allocation3], 0
      %s18 = sshll.u32 %s0, 4
      %s19 = int_to_ptr.hbm [resolvable:$true] %s18
      %s20 = sshll.u32 [#allocation2], 4
      %s21 = int_to_ptr.vmem [resolvable:$true] %s20
      %23 = dma.hbm_to_vmem [thread:$0]  %s19, 128, %s21, [#allocation3]
    $region5: #{contrastive_head_forward.1} parent=1 // pred_fallthru
      _
    // Predicated region
    $region6: #{contrastive_head_forward.1} parent=1 // pred_check
      _
    $region7: #{contrastive_head_forward.1} parent=1 // pred_check_branch
      %25 = sbr.rel (0) target = $region9
    $region8: #{contrastive_head_forward.1} parent=1 // pred_region
      %27 = vsyncadd [#allocation6], 0
      %s28 = sshll.u32 %s1, 4
      %s29 = int_to_ptr.hbm [resolvable:$true] %s28
      %s30 = sshll.u32 [#allocation5], 4
      %s31 = int_to_ptr.vmem [resolvable:$true] %s30
      %36 = dma.hbm_to_vmem [thread:$0]  %s29, 512, %s31, [#allocation6], 128, 128, 8
    $region9: #{contrastive_head_forward.1} parent=1 // pred_fallthru
      _
    // Predicated region
    $region10: #{contrastive_head_forward.1} parent=1 // pred_check
      _
    $region11: #{contrastive_head_forward.1} parent=1 // pred_check_branch
      %38 = sbr.rel (0) target = $region13
    $region12: #{contrastive_head_forward.1} parent=1 // pred_region
      _
    $region13: #{contrastive_head_forward.1} parent=1 // pred_fallthru
      _
    // Predicated region
    $region14: #{contrastive_head_forward.1} parent=1 // pred_check
      _
    $region15: #{contrastive_head_forward.1} parent=1 // pred_check_branch
      %40 = sbr.rel (0) target = $region17
    $region16: #{contrastive_head_forward.1} parent=1 // pred_region
      %42 = vsyncadd [#allocation6], 0
      %s43 = sshll.u32 %s3, 4
      %s44 = int_to_ptr.hbm [resolvable:$true] %s43
      %s45 = sshll.u32 [#allocation7], 4
      %s46 = int_to_ptr.vmem [resolvable:$true] %s45
      %51 = dma.hbm_to_vmem [thread:$0]  %s44, 512, %s46, [#allocation6], 128, 128, 8
    $region17: #{contrastive_head_forward.1} parent=1 // pred_fallthru
      _
    // Predicated region
    $region18: #{contrastive_head_forward.1} parent=1 // pred_check
      _
    $region19: #{contrastive_head_forward.1} parent=1 // pred_check_branch
      %53 = sbr.rel (0) target = $region21
    $region20: #{contrastive_head_forward.1} parent=1 // pred_region
      _
    $region21: #{contrastive_head_forward.1} parent=1 // pred_fallthru
      _
    // Predicated region
    $region22: #{contrastive_head_forward.1} parent=1 // pred_check
      _
    $region23: #{contrastive_head_forward.1} parent=1 // pred_check_branch
      %55 = sbr.rel (0) target = $region25
    $region24: #{contrastive_head_forward.1} parent=1 // pred_region
      %57 = dma.done [#allocation3], 128
    $region25: #{contrastive_head_forward.1} parent=1 // pred_fallthru
      _
    // Predicated region
    $region26: #{contrastive_head_forward.1} parent=1 // pred_check
      _
    $region27: #{contrastive_head_forward.1} parent=1 // pred_check_branch
      %59 = sbr.rel (0) target = $region29
    $region28: #{contrastive_head_forward.1} parent=1 // pred_region
      %61 = dma.done [#allocation6], 512
    $region29: #{contrastive_head_forward.1} parent=1 // pred_fallthru
      _
    // Predicated region
    $region30: #{contrastive_head_forward.1} parent=1 // pred_check
      _
    $region31: #{contrastive_head_forward.1} parent=1 // pred_check_branch
      %63 = sbr.rel (0) target = $region33
    $region32: #{contrastive_head_forward.1} parent=1 // pred_region
      %65 = dma.done [#allocation6], 512
    $region33: #{contrastive_head_forward.1} parent=1 // pred_fallthru
      _
    %v66 = vld [vmem:[#allocation2] sm:$0xff]
    %v67 = vld [vmem:[#allocation5] sm:$0xff]
    %v68 = vld [vmem:[#allocation5 + $0x8] sm:$0xff]
    %v69 = vld [vmem:[#allocation5 + $0x10] sm:$0xff]
    %v70 = vld [vmem:[#allocation5 + $0x18] sm:$0xff]
    %v71 = vld [vmem:[%s2] sm:$0x1]
    %v73 = vperm.slane %v71, 0
    %vm75 = vcmask 261120
    %v77 = vsel %vm75, %v66, 0
    %79 = vmatpush.msra.mxu0 0.0
    %80 = vmatpush.msra.mxu0 0.0
    %81 = vmatpush.msra.mxu0 0.0
    %82 = vmatpush.msra.mxu0 0.0
    %83 = vmatpush.msra.mxu0 0.0
    %84 = vmatpush.msra.mxu0 0.0
    %85 = vmatpush.msra.mxu0 0.0
    %86 = vmatpush.msra.mxu0 0.0
    %87 = vmatpush.msra.mxu0 0.0
    %88 = vmatpush.msra.mxu0 0.0
    %89 = vmatpush.msra.mxu0 0.0
    %90 = vmatpush.msra.mxu0 0.0
    %91 = vmatpush.msra.mxu0 %v70
    %92 = vmatpush.msra.mxu0 %v69
    %93 = vmatpush.msra.mxu0 %v68
    %94 = vmatpush.msra.mxu0 %v67
    %95 = vmatmul.f32.gmra.mxu0 %v77
    %v96 = vpop.f32.mrf.mxu0
    %v97 = vadd.f32 %v73, %v96
    %98 = vdwg.mxu0
    %v99 = vmul.f32 %v97, 0.5
    %v100 = vmul.f32 %v97, 0.70710677
    %v101 = vmul.f32 %v100, %v100
    %v102 = vmin.f32 16.0, %v101
    %v103 = vmul.f32 %v102, 2.1237322e-06
    %v104 = vadd.f32 %v103, 0.00028619796
    %v105 = vmul.f32 %v102, %v104
    %v106 = vadd.f32 %v105, 0.0036580483
    %v107 = vmul.f32 %v102, %v106
    %v108 = vadd.f32 %v107, 0.05243302
    %v109 = vmul.f32 %v102, %v108
    %v110 = vadd.f32 %v109, 0.18741608
    %v111 = vmul.f32 %v102, %v110
    %v112 = vadd.f32 %v111, 1.1283791
    %v113 = vmul.f32 %v100, %v112
    %v114 = vmul.f32 %v102, 3.8918573e-05
    %v115 = vadd.f32 %v114, 0.001143296
    %v116 = vmul.f32 %v102, %v115
    %v117 = vadd.f32 %v116, 0.014752088
    %v118 = vmul.f32 %v102, %v117
    %v119 = vadd.f32 %v118, 0.112945676
    %v120 = vmul.f32 %v102, %v119
    %v121 = vadd.f32 %v120, 0.4994258
    %v122 = vmul.f32 %v102, %v121
    %v123 = vadd.f32 %v122, 1.0
    %v124 = vrcp.pop %v123
    %v125 = vmul.f32 %v123, %v124
    %v126 = vsub.f32 1.0, %v125
    %v127 = vmul.f32 %v124, %v126
    %v128 = vadd.f32 %v124, %v127
    %vm129 = vweird.f32 %v123
    %vm130 = vweird.f32 %v124
    %vm131 = vmor %vm129, %vm130
    %v132 = vsel %vm131, %v124, %v128
    %v133 = vand.u32 2147483647, %v123
    %vm134 = vcmp.eq.f32.partialorder %v133, 8.507059e+37
    %v135 = vand.u32 %v123, 2147483648
    %v136 = vor.u32 1.1754944e-38, %v135
    %v137 = vsel %vm134, %v136, %v132
    %v138 = vmul.f32 %v113, %v137
    %v139 = vmin.f32 %v138, 1.0
    %v140 = vmax.f32 %v139, -1.0
    %v141 = vadd.f32 %v140, 1.0
    %v142 = vmul.f32 %v99, %v141
    %v143 = vld [vmem:[#allocation7] sm:$0xff]
    %v144 = vld [vmem:[#allocation7 + $0x8] sm:$0xff]
    %v145 = vld [vmem:[#allocation7 + $0x10] sm:$0xff]
    %v146 = vld [vmem:[#allocation7 + $0x18] sm:$0xff]
    %v147 = vld [vmem:[%s4] sm:$0x1]
    %v149 = vperm.slane %v147, 0
    %v152 = vsel %vm75, %v142, 0
    %154 = vmatpush.msra.mxu0 0.0
    %155 = vmatpush.msra.mxu0 0.0
    %156 = vmatpush.msra.mxu0 0.0
    %157 = vmatpush.msra.mxu0 0.0
    %158 = vmatpush.msra.mxu0 0.0
    %159 = vmatpush.msra.mxu0 0.0
    %160 = vmatpush.msra.mxu0 0.0
    %161 = vmatpush.msra.mxu0 0.0
    %162 = vmatpush.msra.mxu0 0.0
    %163 = vmatpush.msra.mxu0 0.0
    %164 = vmatpush.msra.mxu0 0.0
    %165 = vmatpush.msra.mxu0 0.0
    %166 = vmatpush.msra.mxu0 %v146
    %167 = vmatpush.msra.mxu0 %v145
    %168 = vmatpush.msra.mxu0 %v144
    %169 = vmatpush.msra.mxu0 %v143
    %170 = vmatmul.f32.gmra.mxu0 %v152
    %v171 = vpop.f32.mrf.mxu0
    %v172 = vadd.f32 %v149, %v171
    %173 = vdwg.mxu0
    %v174 = vmul.f32 %v172, %v172
    %175 = vadd.xlane.f32.xlu0 %v174
    %v176 = vpop.xlane.xlu0 %175
    %v177 = vmax.f32 %v176, 1e-24
    %v178 = vrsqrt.pop %v177
    %v179 = vmul.f32 %v178, %v177
    %v180 = vmul.f32 %v179, %v178
    %v181 = vmul.f32 0.5, %v180
    %v182 = vsub.f32 1.5, %v181
    %v183 = vmul.f32 %v178, %v182
    %vm184 = vweird.f32 %v177
    %vm185 = vweird.f32 %v178
    %vm186 = vmor %vm184, %vm185
    %v187 = vsel %vm186, %v178, %v183
    %v188 = vmul.f32 %v172, %v187
    %189 = vst [vmem:[#allocation8] sm:$0xff] %v188
    // Predicated region
    $region34: #{contrastive_head_forward.1} parent=1 // pred_check
      _
    $region35: #{contrastive_head_forward.1} parent=1 // pred_check_branch
      %191 = sbr.rel (0) target = $region37
    $region36: #{contrastive_head_forward.1} parent=1 // pred_region
      %193 = vsyncadd [#allocation4], 0
      %s195 = sshll.u32 [#allocation8], 4
      %s196 = int_to_ptr.vmem [resolvable:$true] %s195
      %s197 = sshll.u32 %s5, 4
      %s198 = int_to_ptr.hbm [resolvable:$true] %s197
      %200 = dma.vmem_to_hbm [thread:$0]  %s196, 128, %s198, [#allocation4]
    $region37: #{contrastive_head_forward.1} parent=1 // pred_fallthru
      _
    // Predicated region
    $region38: #{contrastive_head_forward.1} parent=1 // pred_check
      _
    $region39: #{contrastive_head_forward.1} parent=1 // pred_check_branch
      %202 = sbr.rel (0) target = $region41
    $region40: #{contrastive_head_forward.1} parent=1 // pred_region
      %204 = dma.done [#allocation4], 128
    $region41: #{contrastive_head_forward.1} parent=1 // pred_fallthru
      _
    %205 = vsyncpa [#allocation3], 1
    %206 = vsyncpa [#allocation6], 1
    %207 = vsyncpa [#allocation4], 1

</llo_original>
